<compile_context>
chip_gen: v7x
topology: tpu7x:2x2x1
jax: 0.10.0
libtpu: 0.0.40
codegen_flags: <defaults>
</compile_context>

<pallas_src>
import jax
import jax.numpy as jnp
from jax.experimental import pallas as pl
from jax.experimental.pallas import tpu as pltpu


def _variance_norm_kernel(x_ref, alpha_ref, o_ref):
    # x_ref:     (1, C, HW)  one batch sample, lane-dense spatial axis
    # alpha_ref: (C, 1)      per-channel scale
    # o_ref:     (1, C, HW)
    x = x_ref[...]
    hw = x.shape[-1]

    # Unbiased variance over the spatial axis (torch.var default), single pass.
    s = jnp.sum(x, axis=-1, keepdims=True)             # (1, C, 1)
    ss = jnp.sum(x * x, axis=-1, keepdims=True)        # (1, C, 1)
    var = (ss - s * s * (1.0 / hw)) * (1.0 / (hw - 1))

    scale = alpha_ref[...][None] * jax.lax.rsqrt(var + 1e-5)   # (1, C, 1)
    o_ref[...] = x * scale


def variance_norm_3d(x, alpha):
    """Forward pass of VarianceNorm3d.  x: (N, C, H, W), alpha: (C,)."""
    N, C, H, W = x.shape
    HW = H * W
    x3 = x.reshape(N, C, HW).astype(jnp.float32)
    alpha2 = alpha.reshape(C, 1).astype(jnp.float32)

    out3 = pl.pallas_call(
        _variance_norm_kernel,
        grid=(N,),
        in_specs=[
            pl.BlockSpec((1, C, HW), lambda n: (n, 0, 0)),
            pl.BlockSpec((C, 1), lambda n: (0, 0)),
        ],
        out_specs=pl.BlockSpec((1, C, HW), lambda n: (n, 0, 0)),
        out_shape=jax.ShapeDtypeStruct((N, C, HW), jnp.float32),
        compiler_params=pltpu.CompilerParams(dimension_semantics=("parallel",)),
    )(x3, alpha2)

    return out3.reshape(N, C, H, W)


def _reference(x, alpha):
    """Pure-jnp transcription of the torch forward."""
    var = jnp.var(x, axis=(2, 3), keepdims=True, ddof=1)
    h = x / jnp.sqrt(var + 1e-5)
    return alpha.reshape(1, -1, 1, 1) * h


if __name__ == "__main__":
    N, C, H, W = 2, 4, 16, 16

    key = jax.random.PRNGKey(0)
    kx, ka = jax.random.split(key)
    x = jax.random.normal(kx, (N, C, H, W), jnp.float32)
    # alpha ~ Normal(1, 0.02), matching `self.alpha.data.normal_(1, 0.02)`.
    alpha = 1.0 + 0.02 * jax.random.normal(ka, (C,), jnp.float32)

    out = variance_norm_3d(x, alpha)
    out = jax.block_until_ready(out)

    ref = _reference(x, alpha)
    assert out.shape == ref.shape == (N, C, H, W)
    assert jnp.allclose(out, ref, atol=1e-4, rtol=1e-4)

    print("KERNEL_OK")
</pallas_src>

<mosaic_0001>
module attributes {stable_mosaic.version = 11 : i64} {
  func.func @_variance_norm_kernel(%arg0: i32, %arg1: memref<1x4x256xf32, #tpu.memory_space<vmem>>, %arg2: memref<4x1xf32, #tpu.memory_space<vmem>>, %arg3: memref<1x4x256xf32, #tpu.memory_space<vmem>>) attributes {dimension_semantics = [#tpu.dimension_semantics<parallel>], iteration_bounds = array<i64: 2>, scalar_prefetch = 0 : i64, scratch_operands = 0 : i64, tpu.core_type = #tpu.core_type<tc>, window_params = [{transform_indices = @transform_0, window_bounds = array<i64: 1, 4, 256>}, {pipeline_mode = #tpu.pipeline_mode<synchronous>, transform_indices = @transform_1, window_bounds = array<i64: 4, 1>}, {transform_indices = @transform_2, window_bounds = array<i64: 1, 4, 256>}]} {
    %c0 = arith.constant 0 : index
    %c0_0 = arith.constant 0 : index
    %c0_1 = arith.constant 0 : index
    %0 = vector.load %arg1[%c0, %c0_0, %c0_1] : memref<1x4x256xf32, #tpu.memory_space<vmem>>, vector<1x4x256xf32>
    %cst = arith.constant dense<0.000000e+00> : vector<1x4xf32>
    %1 = vector.multi_reduction <add>, %0, %cst [2] : vector<1x4x256xf32> to vector<1x4xf32>
    %2 = vector.shape_cast %1 : vector<1x4xf32> to vector<1x4x1xf32>
    %3 = arith.mulf %0, %0 : vector<1x4x256xf32>
    %cst_2 = arith.constant dense<0.000000e+00> : vector<1x4xf32>
    %4 = vector.multi_reduction <add>, %3, %cst_2 [2] : vector<1x4x256xf32> to vector<1x4xf32>
    %5 = vector.shape_cast %4 : vector<1x4xf32> to vector<1x4x1xf32>
    %6 = arith.mulf %2, %2 : vector<1x4x1xf32>
    %cst_3 = arith.constant 3.906250e-03 : f32
    %7 = vector.broadcast %cst_3 : f32 to vector<1x4x1xf32>
    %8 = arith.mulf %6, %7 : vector<1x4x1xf32>
    %9 = arith.subf %5, %8 : vector<1x4x1xf32>
    %cst_4 = arith.constant 0.00392156886 : f32
    %10 = vector.broadcast %cst_4 : f32 to vector<1x4x1xf32>
    %11 = arith.mulf %9, %10 : vector<1x4x1xf32>
    %c0_5 = arith.constant 0 : index
    %c0_6 = arith.constant 0 : index
    %12 = vector.load %arg2[%c0_5, %c0_6] : memref<4x1xf32, #tpu.memory_space<vmem>>, vector<4x1xf32>
    %13 = vector.shape_cast %12 : vector<4x1xf32> to vector<1x4x1xf32>
    %cst_7 = arith.constant 9.99999974E-6 : f32
    %14 = vector.broadcast %cst_7 : f32 to vector<1x4x1xf32>
    %15 = arith.addf %11, %14 : vector<1x4x1xf32>
    %16 = math.rsqrt %15 : vector<1x4x1xf32>
    %17 = arith.mulf %13, %16 : vector<1x4x1xf32>
    %18 = vector.broadcast %17 : vector<1x4x1xf32> to vector<1x4x256xf32>
    %19 = arith.mulf %0, %18 : vector<1x4x256xf32>
    %c0_8 = arith.constant 0 : index
    %c0_9 = arith.constant 0 : index
    %c0_10 = arith.constant 0 : index
    %20 = vector.load %arg3[%c0_8, %c0_9, %c0_10] : memref<1x4x256xf32, #tpu.memory_space<vmem>>, vector<1x4x256xf32>
    tpu.vector_store %arg3[%c0_8, %c0_9, %c0_10], %19 {strides = array<i32>} : memref<1x4x256xf32, #tpu.memory_space<vmem>>, vector<1x4x256xf32>,
    return
  }
  func.func @transform_0(%arg0: i32) -> (i32, i32, i32) {
    %c0_i32 = arith.constant 0 : i32
    %c0_i32_0 = arith.constant 0 : i32
    %c0_i32_1 = arith.constant 0 : i32
    return %arg0, %c0_i32, %c0_i32_0 : i32, i32, i32
  }
  func.func @transform_1(%arg0: i32) -> (i32, i32) {
    %c0_i32 = arith.constant 0 : i32
    %c0_i32_0 = arith.constant 0 : i32
    %c0_i32_1 = arith.constant 0 : i32
    return %c0_i32, %c0_i32_0 : i32, i32
  }
  func.func @transform_2(%arg0: i32) -> (i32, i32, i32) {
    %c0_i32 = arith.constant 0 : i32
    %c0_i32_0 = arith.constant 0 : i32
    %c0_i32_1 = arith.constant 0 : i32
    return %arg0, %c0_i32, %c0_i32_0 : i32, i32, i32
  }
}

</mosaic_0001>

<llo_original>
// kernel: tpu_custom_call.1
$region0: #{tpu_custom_call.1}
  #allocation0 [shape = 'u32[]', space=smem, size = 0x4, offset = 0x4, fixed_abs, tag = 'smem constant byte address 0x4 - core index']
  #allocation1 [shape = 'u32[144,128]{1,0:T(1,128)}', space=vmem, size = 0x12000, scoped, tag = 'internal scratch']
  %s0 = inlined_call_operand.hbm [shape: f32[2,4,256], index: 0, kind: input, shape index: {}]
  %s1 = inlined_call_operand.vmem [shape: f32[4,1], index: 1, kind: input, shape index: {}]
  %s2 = inlined_call_operand.hbm [shape: f32[2,4,256], index: 2, kind: output, shape index: {}]
  %s3 = sld [smem:[#allocation0]]
  $region45: #{tpu_custom_call.1} parent=0
    _
  %s5 = ssub.s32 1, %s3
  %s6 = scalar_select 0, %s5, %s3
  $region1: #{tpu_custom_call.1} parent=0
    #allocation2 [shape = 'u8[8192]{0}', space=vmem, size = 0x2000, scoped, tag = 'input window, operand 0']
    #allocation3 [shape = 's32[2]{0}', space=sflag, size = 0x8, scoped, tag = 'scoped memory for tpu_custom_call.1']
    #allocation4 [shape = 's32[2]{0}', space=sflag, size = 0x8, scoped, tag = 'scoped memory for tpu_custom_call.1']
    #allocation5 [shape = 'u8[8192]{0}', space=vmem, size = 0x2000, scoped, tag = 'output window, operand 0']
    %7 = vsyncpa [#allocation3], 0
    %s8 = scalar_lea.sflag [#allocation3], 1
    %9 = vsyncpa %s8, 0
    %10 = vsyncpa [#allocation4], 0
    %s11 = scalar_lea.sflag [#allocation4], 1
    %12 = vsyncpa %s11, 0
    loop: start=0, step=1, limit=4
    $region2: #{tpu_custom_call.1} parent=1 // loop_pre_header
      _
    $region3: #{tpu_custom_call.1} parent=1 // loop_header
      %s14 = sphi 0, %s18
      %p15 = scmp.ge.s32.totalorder %s14, 4
      %s24 = sphi 0, %s26
      %s27 = sphi 0, %s24
      %s28 = sphi 0, %s27
      %s44 = sphi 0, %s28
      %s48 = sphi 0, %s48
      %s50 = sphi 0, %s48
      %s51 = sphi 0, %s50
      %s65 = sphi 0, %s51
      %s71 = sphi 0, %s73
      %s74 = sphi 0, %s71
      %s75 = sphi 0, %s74
      %s91 = sphi 0, %s75
    $region4: #{tpu_custom_call.1} parent=1 // loop_header_branch
      %17 = sbr.rel (%p15) target = $region8
    $region5: #{tpu_custom_call.1} parent=1 // loop_body
      %s19 = ssub.s32 %s14, 1
      %s20 = ssub.s32 %s14, 2
      %s21 = sadd.s32 %s14, 1
      %s22 = ssub.s32 %s14, %s21
      %p23 = scmp.eq.s32.totalorder %s22, 0
      %s25 = sadd.s32 %s24, 1
      %s26 = scalar_select %p23, %s24, %s25
      %p29 = pneg %p23
      %p30 = scmp.eq.s32.totalorder %s14, 1
      %p31 = por %p29, %p30
      %p32 = scmp.ne.s32.totalorder %s24, %s27
      %p33 = scmp.eq.s32.totalorder %s14, 0
      %p34 = por %p32, %p33
      %p35 = scmp.ne.s32.totalorder %s24, %s27
      %p36 = scmp.eq.s32.totalorder %s19, 1
      %p37 = por %p35, %p36
      %p38 = scmp.ne.s32.totalorder %s27, %s28
      %p39 = scmp.eq.s32.totalorder %s19, 0
      %p40 = por %p38, %p39
      %p41 = scmp.ne.s32.totalorder %s27, %s28
      %p42 = scmp.eq.s32.totalorder %s20, 1
      %p43 = por %p41, %p42
      %p45 = scmp.ne.s32.totalorder %s28, %s44
      %p46 = scmp.eq.s32.totalorder %s20, 0
      %p47 = por %p45, %p46
      %s49 = sadd.s32 %s48, 1
      %p52 = scmp.eq.s32.totalorder %s14, 1
      %p53 = scmp.ne.s32.totalorder %s48, %s50
      %p54 = scmp.eq.s32.totalorder %s14, 0
      %p55 = por %p53, %p54
      %p56 = scmp.ne.s32.totalorder %s48, %s50
      %p57 = scmp.eq.s32.totalorder %s19, 1
      %p58 = por %p56, %p57
      %p59 = scmp.ne.s32.totalorder %s50, %s51
      %p60 = scmp.eq.s32.totalorder %s19, 0
      %p61 = por %p59, %p60
      %p62 = scmp.ne.s32.totalorder %s50, %s51
      %p63 = scmp.eq.s32.totalorder %s20, 1
      %p64 = por %p62, %p63
      %p66 = scmp.ne.s32.totalorder %s51, %s65
      %p67 = scmp.eq.s32.totalorder %s20, 0
      %p68 = por %p66, %p67
      %s69 = ssub.s32 %s14, %s21
      %p70 = scmp.eq.s32.totalorder %s69, 0
      %s72 = sadd.s32 %s71, 1
      %s73 = scalar_select %p70, %s71, %s72
      %p76 = pneg %p70
      %p77 = scmp.eq.s32.totalorder %s14, 1
      %p78 = por %p76, %p77
      %p79 = scmp.ne.s32.totalorder %s71, %s74
      %p80 = scmp.eq.s32.totalorder %s14, 0
      %p81 = por %p79, %p80
      %p82 = scmp.ne.s32.totalorder %s71, %s74
      %p83 = scmp.eq.s32.totalorder %s19, 1
      %p84 = por %p82, %p83
      %p85 = scmp.ne.s32.totalorder %s74, %s75
      %p86 = scmp.eq.s32.totalorder %s19, 0
      %p87 = por %p85, %p86
      %p88 = scmp.ne.s32.totalorder %s74, %s75
      %p89 = scmp.eq.s32.totalorder %s20, 1
      %p90 = por %p88, %p89
      %p92 = scmp.ne.s32.totalorder %s75, %s91
      %p93 = scmp.eq.s32.totalorder %s20, 0
      %p94 = por %p92, %p93
      %p95 = scmp.le.s32.totalorder 1, %s14
      %p96 = scmp.lt.s32.totalorder %s14, 3
      %p97 = pnand %p95, %p96
      %p98 = pneg %p97
      // Predicated region
      $region9: #{tpu_custom_call.1} parent=5 // pred_check
        _
      $region10: #{tpu_custom_call.1} parent=5 // pred_check_branch
        %100 = sbr.rel (%p97) target = $region12
      $region11: #{tpu_custom_call.1} parent=5 // pred_region
        %s101 = ssub.s32 %s14, 1
        // Predicated region
        $region13: #{tpu_custom_call.1} parent=11 // pred_check
          %p102 = pneg %p61
        $region14: #{tpu_custom_call.1} parent=11 // pred_check_branch
          %104 = sbr.rel (%p102) target = $region16
        $region15: #{tpu_custom_call.1} parent=11 // pred_region
          _
        $region16: #{tpu_custom_call.1} parent=11 // pred_fallthru
          _
      $region12: #{tpu_custom_call.1} parent=5 // pred_fallthru
        _
      %p105 = scmp.lt.s32.totalorder %s14, 2
      // Predicated region
      $region17: #{tpu_custom_call.1} parent=5 // pred_check
        %p106 = pneg %p105
      $region18: #{tpu_custom_call.1} parent=5 // pred_check_branch
        %108 = sbr.rel (%p106) target = $region20
      $region19: #{tpu_custom_call.1} parent=5 // pred_region
        // Predicated region
        $region21: #{tpu_custom_call.1} parent=19 // pred_check
          %p109 = pneg %p34
        $region22: #{tpu_custom_call.1} parent=19 // pred_check_branch
          %111 = sbr.rel (%p109) target = $region24
        $region23: #{tpu_custom_call.1} parent=19 // pred_region
          %s112 = sand.u32 %s24, 1
          %s113 = scalar_lea.sflag [#allocation3], %s112
          %s114 = sand.u32 %s24, 1
          %s115 = smul.addr %s114, 8
          %s116 = scalar_lea.vmem [#allocation2], %s115
          %s118 = ssub.s32 128, 128
          %119 = vsyncadd %s113, %s118
          %s120 = smul.addr %s14, 2
          %s121 = smul.addr %s120, 64
          %s122 = scalar_lea.hbm %s0, %s121
          %s124 = sshll.u32 %s116, 4
          %s125 = int_to_ptr.vmem [resolvable:$true] %s124
          %127 = dma.hbm_to_vmem [thread:$0]  %s122, 128, %s125, %s113
        $region24: #{tpu_custom_call.1} parent=19 // pred_fallthru
          _
      $region20: #{tpu_custom_call.1} parent=5 // pred_fallthru
        _
      %p128 = scmp.le.s32.totalorder 1, %s14
      %p129 = scmp.lt.s32.totalorder %s14, 3
      %p130 = pnand %p128, %p129
      %p131 = pneg %p130
      // Predicated region
      $region25: #{tpu_custom_call.1} parent=5 // pred_check
        _
      $region26: #{tpu_custom_call.1} parent=5 // pred_check_branch
        %133 = sbr.rel (%p130) target = $region28
      $region27: #{tpu_custom_call.1} parent=5 // pred_region
        %s134 = ssub.s32 %s14, 1
        %s135 = sand.u32 %s27, 1
        %s136 = scalar_lea.sflag [#allocation3], %s135
        %s137 = sand.u32 %s27, 1
        %s138 = smul.addr %s137, 8
        %s139 = scalar_lea.vmem [#allocation2], %s138
        // Predicated region
        $region29: #{tpu_custom_call.1} parent=27 // pred_check
          %p140 = pneg %p40
        $region30: #{tpu_custom_call.1} parent=27 // pred_check_branch
          %142 = sbr.rel (%p140) target = $region32
        $region31: #{tpu_custom_call.1} parent=27 // pred_region
          %143 = dma.done %s136, 128
        $region32: #{tpu_custom_call.1} parent=27 // pred_fallthru
          _
        %s144 = sand.u32 %s27, 1
        %s145 = scalar_lea.sflag [#allocation3], %s144
        %s146 = sand.u32 %s27, 1
        %s147 = smul.addr %s146, 8
        %s148 = scalar_lea.vmem [#allocation2], %s147
        %p149 = pneg %p40
        %p150 = pneg %p37
        %p151 = pneg %p61
        %p152 = pneg %p58
        %p153 = pneg %p87
        %p154 = pneg %p84
        %s155 = sand.u32 %s74, 1
        %s156 = scalar_lea.sflag [#allocation4], %s155
        %s157 = sand.u32 %s74, 1
        %s158 = smul.addr %s157, 8
        %s159 = scalar_lea.vmem [#allocation5], %s158
        %v160 = vld [vmem:[%s139] sm:$0xff]
        %v162 = vcombine.high %v160, %v160
        %vm164 = vcmask 1043456
        %v165 = vsel %vm164, %v160, 0.0
        %v166 = vsel %vm164, %v162, 0.0
        %v167 = vadd.f32 %v165, %v166
        %168 = vadd.xlane.f32.xlu0 %v167
        %v169 = vpop.xlane.xlu0 %168
        %v170 = vmul.f32 %v160, %v160
        %v172 = vcombine.high %v170, %v170
        %v174 = vsel %vm164, %v170, 0.0
        %v175 = vsel %vm164, %v172, 0.0
        %v176 = vadd.f32 %v174, %v175
        %177 = vadd.xlane.f32.xlu0 %v176
        %v178 = vpop.xlane.xlu0 %177
        %v179 = vmul.f32 %v169, %v169
        %v180 = vmul.f32 %v179, 0.00390625
        %v181 = vsub.f32 %v178, %v180
        %v182 = vmul.f32 %v181, 0.003921569
        %v183 = vld [vmem:[%s1] sm:$0xf]
        %v184 = vadd.f32 %v182, 1e-05
        %v185 = vrsqrt.pop %v184
        %v186 = vmul.f32 %v183, %v185
        %188 = vset.pattern.permute.xlu0 0
        %189 = vperm.xlu0 %188, %v186
        %v190 = vpop.permute.xlu0 %189
        %v192 = vunpack.c.l.s4 839922192
        %v193 = vunpack.c.0.s8 %v192
        %v194 = vlaneseq
        %v195 = vshrl.u32 %v194, 7
        %v196 = vsub.s32 %v193, %v195
        %v197 = vrot.slane %v190, %v196
        %v199 = vmul.f32 %v160, %v197
        %200 = vst [vmem:[%s159] sm:$0xff] %v199
        %s201 = sand.u32 %s74, 1
        %s202 = scalar_lea.sflag [#allocation4], %s201
        %s203 = sand.u32 %s74, 1
        %s204 = smul.addr %s203, 8
        %s205 = scalar_lea.vmem [#allocation5], %s204
        // Predicated region
        $region33: #{tpu_custom_call.1} parent=27 // pred_check
          %p206 = pneg %p84
        $region34: #{tpu_custom_call.1} parent=27 // pred_check_branch
          %208 = sbr.rel (%p206) target = $region36
        $region35: #{tpu_custom_call.1} parent=27 // pred_region
          %s210 = ssub.s32 128, 128
          %211 = vsyncadd %s202, %s210
          %s212 = smul.addr %s19, 2
          %s213 = smul.addr %s212, 64
          %s214 = scalar_lea.hbm %s2, %s213
          %s216 = sshll.u32 %s205, 4
          %s217 = int_to_ptr.vmem [resolvable:$true] %s216
          %219 = dma.vmem_to_hbm [thread:$0]  %s217, 128, %s214, %s202
        $region36: #{tpu_custom_call.1} parent=27 // pred_fallthru
          _
      $region28: #{tpu_custom_call.1} parent=5 // pred_fallthru
        _
      %p220 = scmp.le.s32.totalorder 2, %s14
      // Predicated region
      $region37: #{tpu_custom_call.1} parent=5 // pred_check
        %p221 = pneg %p220
      $region38: #{tpu_custom_call.1} parent=5 // pred_check_branch
        %223 = sbr.rel (%p221) target = $region40
      $region39: #{tpu_custom_call.1} parent=5 // pred_region
        %s224 = ssub.s32 %s14, 2
        // Predicated region
        $region41: #{tpu_custom_call.1} parent=39 // pred_check
          %p225 = pneg %p90
        $region42: #{tpu_custom_call.1} parent=39 // pred_check_branch
          %227 = sbr.rel (%p225) target = $region44
        $region43: #{tpu_custom_call.1} parent=39 // pred_region
          %s228 = sand.u32 %s75, 1
          %s229 = scalar_lea.sflag [#allocation4], %s228
          %s230 = sand.u32 %s75, 1
          %s231 = smul.addr %s230, 8
          %s232 = scalar_lea.vmem [#allocation5], %s231
          %233 = dma.done %s229, 128
        $region44: #{tpu_custom_call.1} parent=39 // pred_fallthru
          _
      $region40: #{tpu_custom_call.1} parent=5 // pred_fallthru
        _
    $region6: #{tpu_custom_call.1} parent=1 // loop_footer
      %s18 = sadd.s32 1, %s14
    $region7: #{tpu_custom_call.1} parent=1 // loop_footer_branch
      %13 = sbr.rel target = $region3
    $region8: #{tpu_custom_call.1} parent=1 // loop_exit
      _
    %234 = vsyncpa [#allocation3], 1
    %s235 = scalar_lea.sflag [#allocation3], 1
    %236 = vsyncpa %s235, 1
    %237 = vsyncpa [#allocation4], 1
    %s238 = scalar_lea.sflag [#allocation4], 1
    %239 = vsyncpa %s238, 1

</llo_original>
